<compile_context>
chip_gen: v5e
topology: v5e:2x2
jax: 0.10.0
libtpu: 0.0.40
codegen_flags: <defaults>
</compile_context>

<pallas_src>
import functools

import jax
import jax.numpy as jnp
from jax.experimental import pallas as pl
from jax.experimental.pallas import tpu as pltpu


def instance_prompt_kernel(x_ref, w1_ref, b1_ref, w2_ref, b2_ref, o_ref, *,
                           compute_dtype, approximate_gelu):
    # x_ref : (TB, D)  native dtype     w1_ref: (D, H)  native     b1_ref: (1, H)  f32
    # w2_ref: (H, PD)  native           b2_ref: (1, PD) f32        o_ref : (TB, PD)
    x = x_ref[...]
    w1 = w1_ref[...]
    w2 = w2_ref[...]
    if compute_dtype is not None:
        # Cast to the MXU dtype *inside* the kernel: no extra wrapper-side HBM pass.
        x = x.astype(compute_dtype)
        w1 = w1.astype(compute_dtype)
        w2 = w2.astype(compute_dtype)

    # Linear 1: (bf16, bf16) MXU inputs, f32 accumulate; bias add + GELU in f32
    # (v5e's VPU/EUP have no bf16 datapath).
    h = jnp.dot(x, w1, preferred_element_type=jnp.float32)
    h = h + b1_ref[...]
    h = jax.nn.gelu(h, approximate=approximate_gelu)

    # Linear 2: cast activations to the MXU dtype only right before the matmul.
    out = jnp.dot(h.astype(w2.dtype), w2, preferred_element_type=jnp.float32)
    out = out + b2_ref[...]
    o_ref[...] = out.astype(o_ref.dtype)


def _round_up(n, m):
    return (n + m - 1) // m * m


_MAX_BLOCK_B = 4096  # double-buffered (4096,128) f32 out tile ~= 4 MiB: fits all gens.


def _default_block_b(B):
    """Batch tile: full batch when small; otherwise an even number (>=2) of grid
    programs (v7x megacore), 16-row granularity (bf16 packs 2 rows per sublane),
    capped at 4096 rows."""
    if B <= 128:
        return B  # single tile; block == full dim is always a legal block shape.
    grid_b = max(2, pl.cdiv(B, _MAX_BLOCK_B))
    if grid_b % 2:
        grid_b += 1  # even program count -> balanced across v7x's two TensorCores.
    return max(16, _round_up(pl.cdiv(B, grid_b), 16))


def instance_prompt_forward(x, w1, b1, w2, b2, num_prompt, bert_latent, *,
                            block_b=None,
                            compute_dtype=jnp.bfloat16,
                            out_dtype=None,
                            approximate_gelu=True):
    """Pallas forward of InstancePrompt.  out_dtype=None keeps parity with the PyTorch
    module (output dtype == x dtype); pass jnp.bfloat16 to halve the dominant HBM
    write stream when the downstream consumer accepts bf16 prompts."""
    B, D = x.shape
    H = w1.shape[1]
    PD = w2.shape[1]
    assert PD == num_prompt * bert_latent and D == bert_latent
    assert w1.shape == (D, H) and w2.shape == (H, PD)
    assert b1.shape[-1] == H and b2.shape[-1] == PD

    out_dtype = jnp.dtype(x.dtype) if out_dtype is None else jnp.dtype(out_dtype)

    if block_b is None:
        block_b = _default_block_b(B)
    else:
        block_b = _round_up(block_b, 16)
    if block_b >= B:
        block_b = B  # one full-batch tile (legal for any B; no padding needed).
    grid_b = pl.cdiv(B, block_b)  # ragged last tile is clamped by Pallas: no pad/slice.

    # Biases as f32 rows (tiny) so the elementwise math stays in f32.
    b1_2d = b1.reshape(1, H).astype(jnp.float32)
    b2_2d = b2.reshape(1, PD).astype(jnp.float32)

    cost = pl.CostEstimate(
        flops=2 * B * (D * H + H * PD),
        transcendentals=B * H,
        bytes_accessed=(B * D * jnp.dtype(x.dtype).itemsize            # x (read once)
                        + D * H * jnp.dtype(w1.dtype).itemsize         # W1
                        + H * PD * jnp.dtype(w2.dtype).itemsize        # W2
                        + (H + PD) * 4                                  # biases
                        + B * PD * out_dtype.itemsize),                 # output write
    )

    kernel = functools.partial(instance_prompt_kernel,
                               compute_dtype=compute_dtype,
                               approximate_gelu=approximate_gelu)

    out_flat = pl.pallas_call(
        kernel,
        out_shape=jax.ShapeDtypeStruct((B, PD), out_dtype),
        grid=(grid_b,),
        in_specs=[
            pl.BlockSpec((block_b, D), lambda i: (i, 0)),   # x tile (native dtype)
            pl.BlockSpec((D, H), lambda i: (0, 0)),         # W1 (resident)
            pl.BlockSpec((1, H), lambda i: (0, 0)),         # b1 (resident)
            pl.BlockSpec((H, PD), lambda i: (0, 0)),        # W2 (resident)
            pl.BlockSpec((1, PD), lambda i: (0, 0)),        # b2 (resident)
        ],
        out_specs=pl.BlockSpec((block_b, PD), lambda i: (i, 0)),
        compiler_params=pltpu.CompilerParams(
            dimension_semantics=("parallel",),              # batch tiles -> both TCs on v7x
        ),
        cost_estimate=cost,
    )(x, w1, b1_2d, w2, b2_2d)

    # matches .view(B, num_prompt, bert_latent)
    return out_flat.reshape(B, num_prompt, bert_latent)


if __name__ == "__main__":
    # Small shapes consistent with the module:
    #   bert_latent = mask.size(-1) = 32, cfg.n_latent = 64, num_prompt = 4, batch = 8
    B = 8
    bert_latent = 32
    n_latent = 64
    num_prompt = 4

    key = jax.random.PRNGKey(0)
    kx, kw1, kb1, kw2, kb2 = jax.random.split(key, 5)

    x = jax.random.normal(kx, (B, bert_latent), dtype=jnp.float32)
    w1 = jax.random.normal(kw1, (bert_latent, n_latent), dtype=jnp.float32) * (1.0 / bert_latent ** 0.5)
    b1 = jax.random.normal(kb1, (n_latent,), dtype=jnp.float32) * 0.01
    w2 = jax.random.normal(kw2, (n_latent, num_prompt * bert_latent), dtype=jnp.float32) * (1.0 / n_latent ** 0.5)
    b2 = jax.random.normal(kb2, (num_prompt * bert_latent,), dtype=jnp.float32) * 0.01

    # Keep the pallas_call inside a jit (small-batch dispatch cost is hidden there).
    fwd = jax.jit(functools.partial(instance_prompt_forward,
                                    num_prompt=num_prompt, bert_latent=bert_latent))
    fwd_bf16 = jax.jit(functools.partial(instance_prompt_forward,
                                         num_prompt=num_prompt, bert_latent=bert_latent,
                                         out_dtype=jnp.bfloat16))

    def ref_fn(xx):
        # bf16-emulated reference matching the kernel's numerics (bf16 MXU inputs,
        # f32 accumulation, tanh GELU) so the tolerance can stay tight.
        bf16 = jnp.bfloat16
        r = jnp.dot(xx.astype(bf16), w1.astype(bf16), preferred_element_type=jnp.float32) + b1
        r = jax.nn.gelu(r, approximate=True)
        r = jnp.dot(r.astype(bf16), w2.astype(bf16), preferred_element_type=jnp.float32) + b2
        return r.reshape(xx.shape[0], num_prompt, bert_latent)

    # 1) dtype-parity path (default out_dtype == x dtype).
    out = jax.block_until_ready(fwd(x, w1, b1, w2, b2))
    assert out.shape == (B, num_prompt, bert_latent)
    assert out.dtype == x.dtype
    assert jnp.allclose(out, ref_fn(x), atol=2e-2, rtol=2e-2)

    # 2) bf16-output path (halves the dominant write stream).
    out_bf16 = jax.block_until_ready(fwd_bf16(x, w1, b1, w2, b2))
    assert out_bf16.dtype == jnp.bfloat16
    assert jnp.allclose(out_bf16.astype(jnp.float32), ref_fn(x), atol=5e-2, rtol=5e-2)

    # 3) ragged batch (B not a multiple of the tile): exercises the pad-free clamped
    #    last-block path (2 grid programs, last tile partially valid).
    B2 = 200
    x2 = jax.random.normal(kx, (B2, bert_latent), dtype=jnp.float32)
    out2 = jax.block_until_ready(fwd(x2, w1, b1, w2, b2))
    assert out2.shape == (B2, num_prompt, bert_latent)
    assert jnp.allclose(out2, ref_fn(x2), atol=2e-2, rtol=2e-2)

    print("KERNEL_OK")
</pallas_src>

<mosaic_0001>
module attributes {stable_mosaic.version = 11 : i64} {
  func.func @instance_prompt_kernel(%arg0: i32, %arg1: memref<8x32xf32, #tpu.memory_space<vmem>>, %arg2: memref<32x64xf32, #tpu.memory_space<vmem>>, %arg3: memref<1x64xf32, #tpu.memory_space<vmem>>, %arg4: memref<64x128xf32, #tpu.memory_space<vmem>>, %arg5: memref<1x128xf32, #tpu.memory_space<vmem>>, %arg6: memref<8x128xf32, #tpu.memory_space<vmem>>) attributes {dimension_semantics = [#tpu.dimension_semantics<parallel>], iteration_bounds = array<i64: 1>, scalar_prefetch = 0 : i64, scratch_operands = 0 : i64, tpu.core_type = #tpu.core_type<tc>, window_params = [{transform_indices = @transform_0, window_bounds = array<i64: 8, 32>}, {pipeline_mode = #tpu.pipeline_mode<synchronous>, transform_indices = @transform_1, window_bounds = array<i64: 32, 64>}, {pipeline_mode = #tpu.pipeline_mode<synchronous>, transform_indices = @transform_2, window_bounds = array<i64: 1, 64>}, {pipeline_mode = #tpu.pipeline_mode<synchronous>, transform_indices = @transform_3, window_bounds = array<i64: 64, 128>}, {pipeline_mode = #tpu.pipeline_mode<synchronous>, transform_indices = @transform_4, window_bounds = array<i64: 1, 128>}, {transform_indices = @transform_5, window_bounds = array<i64: 8, 128>}]} {
    %c0 = arith.constant 0 : index
    %c0_0 = arith.constant 0 : index
    %0 = vector.load %arg1[%c0, %c0_0] : memref<8x32xf32, #tpu.memory_space<vmem>>, vector<8x32xf32>
    %c0_1 = arith.constant 0 : index
    %c0_2 = arith.constant 0 : index
    %1 = vector.load %arg2[%c0_1, %c0_2] : memref<32x64xf32, #tpu.memory_space<vmem>>, vector<32x64xf32>
    %c0_3 = arith.constant 0 : index
    %c0_4 = arith.constant 0 : index
    %2 = vector.load %arg4[%c0_3, %c0_4] : memref<64x128xf32, #tpu.memory_space<vmem>>, vector<64x128xf32>
    %3 = arith.truncf %0 : vector<8x32xf32> to vector<8x32xbf16>
    %4 = arith.truncf %1 : vector<32x64xf32> to vector<32x64xbf16>
    %5 = arith.truncf %2 : vector<64x128xf32> to vector<64x128xbf16>
    %cst = arith.constant dense<0.000000e+00> : vector<8x64xf32>
    %6 = tpu.matmul %3, %4, %cst {dimension_numbers = #tpu.dot_dimension_numbers<[1], [0], [0], [1], [0, 0, 1, 1], [], []>} : vector<8x32xbf16>, vector<32x64xbf16>, vector<8x64xf32> -> vector<8x64xf32>
    %c0_5 = arith.constant 0 : index
    %c0_6 = arith.constant 0 : index
    %7 = vector.load %arg3[%c0_5, %c0_6] : memref<1x64xf32, #tpu.memory_space<vmem>>, vector<1x64xf32>
    %8 = vector.broadcast %7 : vector<1x64xf32> to vector<8x64xf32>
    %9 = arith.addf %6, %8 : vector<8x64xf32>
    %10 = arith.mulf %9, %9 : vector<8x64xf32>
    %11 = arith.mulf %9, %10 : vector<8x64xf32>
    %cst_7 = arith.constant 4.471500e-02 : f32
    %12 = vector.broadcast %cst_7 : f32 to vector<8x64xf32>
    %13 = arith.mulf %12, %11 : vector<8x64xf32>
    %14 = arith.addf %9, %13 : vector<8x64xf32>
    %cst_8 = arith.constant 0.797884583 : f32
    %15 = vector.broadcast %cst_8 : f32 to vector<8x64xf32>
    %16 = arith.mulf %15, %14 : vector<8x64xf32>
    %17 = math.tanh %16 : vector<8x64xf32>
    %cst_9 = arith.constant 1.000000e+00 : f32
    %18 = vector.broadcast %cst_9 : f32 to vector<8x64xf32>
    %19 = arith.addf %18, %17 : vector<8x64xf32>
    %cst_10 = arith.constant 5.000000e-01 : f32
    %20 = vector.broadcast %cst_10 : f32 to vector<8x64xf32>
    %21 = arith.mulf %20, %19 : vector<8x64xf32>
    %22 = arith.mulf %9, %21 : vector<8x64xf32>
    %23 = arith.truncf %22 : vector<8x64xf32> to vector<8x64xbf16>
    %cst_11 = arith.constant dense<0.000000e+00> : vector<8x128xf32>
    %24 = tpu.matmul %23, %5, %cst_11 {dimension_numbers = #tpu.dot_dimension_numbers<[1], [0], [0], [1], [0, 0, 1, 1], [], []>} : vector<8x64xbf16>, vector<64x128xbf16>, vector<8x128xf32> -> vector<8x128xf32>
    %c0_12 = arith.constant 0 : index
    %c0_13 = arith.constant 0 : index
    %25 = vector.load %arg5[%c0_12, %c0_13] : memref<1x128xf32, #tpu.memory_space<vmem>>, vector<1x128xf32>
    %26 = vector.broadcast %25 : vector<1x128xf32> to vector<8x128xf32>
    %27 = arith.addf %24, %26 : vector<8x128xf32>
    %c0_14 = arith.constant 0 : index
    %c0_15 = arith.constant 0 : index
    %28 = vector.load %arg6[%c0_14, %c0_15] : memref<8x128xf32, #tpu.memory_space<vmem>>, vector<8x128xf32>
    tpu.vector_store %arg6[%c0_14, %c0_15], %27 {strides = array<i32>} : memref<8x128xf32, #tpu.memory_space<vmem>>, vector<8x128xf32>,
    return
  }
  func.func @transform_0(%arg0: i32) -> (i32, i32) {
    %c0_i32 = arith.constant 0 : i32
    %c0_i32_0 = arith.constant 0 : i32
    return %arg0, %c0_i32 : i32, i32
  }
  func.func @transform_1(%arg0: i32) -> (i32, i32) {
    %c0_i32 = arith.constant 0 : i32
    %c0_i32_0 = arith.constant 0 : i32
    %c0_i32_1 = arith.constant 0 : i32
    return %c0_i32, %c0_i32_0 : i32, i32
  }
  func.func @transform_2(%arg0: i32) -> (i32, i32) {
    %c0_i32 = arith.constant 0 : i32
    %c0_i32_0 = arith.constant 0 : i32
    %c0_i32_1 = arith.constant 0 : i32
    return %c0_i32, %c0_i32_0 : i32, i32
  }
  func.func @transform_3(%arg0: i32) -> (i32, i32) {
    %c0_i32 = arith.constant 0 : i32
    %c0_i32_0 = arith.constant 0 : i32
    %c0_i32_1 = arith.constant 0 : i32
    return %c0_i32, %c0_i32_0 : i32, i32
  }
  func.func @transform_4(%arg0: i32) -> (i32, i32) {
    %c0_i32 = arith.constant 0 : i32
    %c0_i32_0 = arith.constant 0 : i32
    %c0_i32_1 = arith.constant 0 : i32
    return %c0_i32, %c0_i32_0 : i32, i32
  }
  func.func @transform_5(%arg0: i32) -> (i32, i32) {
    %c0_i32 = arith.constant 0 : i32
    %c0_i32_0 = arith.constant 0 : i32
    return %arg0, %c0_i32 : i32, i32
  }
}

</mosaic_0001>

<llo_original>
// kernel: instance_prompt_forward.1
$region0: #{instance_prompt_forward.1}
  #allocation0 [shape = 'u32[]', space=smem, size = 0x4, offset = 0x4, fixed_abs, tag = 'smem constant byte address 0x4 - core index']
  #allocation1 [shape = 'u32[72,128]{1,0:T(1,128)}', space=vmem, size = 0x9000, scoped, tag = 'internal scratch']
  %s0 = inlined_call_operand.hbm [shape: f32[8,32], index: 0, kind: input, shape index: {}]
  %s1 = inlined_call_operand.hbm [shape: f32[32,64], index: 1, kind: input, shape index: {}]
  %s2 = inlined_call_operand.vmem [shape: f32[1,64], index: 2, kind: input, shape index: {}]
  %s3 = inlined_call_operand.hbm [shape: f32[64,128], index: 3, kind: input, shape index: {}]
  %s4 = inlined_call_operand.vmem [shape: f32[1,128], index: 4, kind: input, shape index: {}]
  %s5 = inlined_call_operand.vmem [shape: f32[8,128], index: 5, kind: output, shape index: {}]
  %s6 = sld [smem:[#allocation0]]
  $region42: #{instance_prompt_forward.1} parent=0
    _
  %s8 = ssub.s32 1, %s6
  %s9 = scalar_select 0, %s8, %s6
  $region1: #{instance_prompt_forward.1} parent=0
    #allocation2 [shape = 'u8[4096]{0}', space=vmem, size = 0x1000, scoped, tag = 'input window, operand 0, single buffered']
    #allocation3 [shape = 's32[1]{0}', space=sflag, size = 0x4, scoped, tag = 'scoped memory for instance_prompt_forward.1']
    #allocation4 [shape = 'u8[16384]{0}', space=vmem, size = 0x4000, scoped, tag = 'input window, operand 1, single buffered']
    #allocation5 [shape = 's32[1]{0}', space=sflag, size = 0x4, scoped, tag = 'scoped memory for instance_prompt_forward.1']
    #allocation6 [shape = 'u8[32768]{0}', space=vmem, size = 0x8000, scoped, tag = 'input window, operand 3, single buffered']
    %10 = vsyncpa [#allocation3], 0
    %11 = vsyncpa [#allocation5], 0
    // Predicated region
    $region2: #{instance_prompt_forward.1} parent=1 // pred_check
      _
    $region3: #{instance_prompt_forward.1} parent=1 // pred_check_branch
      %13 = sbr.rel (0) target = $region5
    $region4: #{instance_prompt_forward.1} parent=1 // pred_region
      %15 = vsyncadd [#allocation3], 0
      %s17 = sshll.u32 %s0, 4
      %s18 = int_to_ptr.hbm [resolvable:$true] %s17
      %s19 = sshll.u32 [#allocation2], 4
      %s20 = int_to_ptr.vmem [resolvable:$true] %s19
      %22 = dma.hbm_to_vmem [thread:$0]  %s18, 128, %s20, [#allocation3]
    $region5: #{instance_prompt_forward.1} parent=1 // pred_fallthru
      _
    // Predicated region
    $region6: #{instance_prompt_forward.1} parent=1 // pred_check
      _
    $region7: #{instance_prompt_forward.1} parent=1 // pred_check_branch
      %24 = sbr.rel (0) target = $region9
    $region8: #{instance_prompt_forward.1} parent=1 // pred_region
      %26 = vsyncadd [#allocation5], 0
      %s27 = sshll.u32 %s1, 4
      %s28 = int_to_ptr.hbm [resolvable:$true] %s27
      %s29 = sshll.u32 [#allocation4], 4
      %s30 = int_to_ptr.vmem [resolvable:$true] %s29
      %35 = dma.hbm_to_vmem [thread:$0]  %s28, 512, %s30, [#allocation5], 128, 128, 8
    $region9: #{instance_prompt_forward.1} parent=1 // pred_fallthru
      _
    // Predicated region
    $region10: #{instance_prompt_forward.1} parent=1 // pred_check
      _
    $region11: #{instance_prompt_forward.1} parent=1 // pred_check_branch
      %37 = sbr.rel (0) target = $region13
    $region12: #{instance_prompt_forward.1} parent=1 // pred_region
      _
    $region13: #{instance_prompt_forward.1} parent=1 // pred_fallthru
      _
    // Predicated region
    $region14: #{instance_prompt_forward.1} parent=1 // pred_check
      _
    $region15: #{instance_prompt_forward.1} parent=1 // pred_check_branch
      %39 = sbr.rel (0) target = $region17
    $region16: #{instance_prompt_forward.1} parent=1 // pred_region
      %41 = vsyncadd [#allocation5], 0
      %s42 = sshll.u32 %s3, 4
      %s43 = int_to_ptr.hbm [resolvable:$true] %s42
      %s44 = sshll.u32 [#allocation6], 4
      %s45 = int_to_ptr.vmem [resolvable:$true] %s44
      %50 = dma.hbm_to_vmem [thread:$0]  %s43, 1024, %s45, [#allocation5], 128, 128, 8
    $region17: #{instance_prompt_forward.1} parent=1 // pred_fallthru
      _
    // Predicated region
    $region18: #{instance_prompt_forward.1} parent=1 // pred_check
      _
    $region19: #{instance_prompt_forward.1} parent=1 // pred_check_branch
      %52 = sbr.rel (0) target = $region21
    $region20: #{instance_prompt_forward.1} parent=1 // pred_region
      _
    $region21: #{instance_prompt_forward.1} parent=1 // pred_fallthru
      _
    // Predicated region
    $region22: #{instance_prompt_forward.1} parent=1 // pred_check
      _
    $region23: #{instance_prompt_forward.1} parent=1 // pred_check_branch
      %54 = sbr.rel (0) target = $region25
    $region24: #{instance_prompt_forward.1} parent=1 // pred_region
      %56 = dma.done [#allocation3], 128
    $region25: #{instance_prompt_forward.1} parent=1 // pred_fallthru
      _
    // Predicated region
    $region26: #{instance_prompt_forward.1} parent=1 // pred_check
      _
    $region27: #{instance_prompt_forward.1} parent=1 // pred_check_branch
      %58 = sbr.rel (0) target = $region29
    $region28: #{instance_prompt_forward.1} parent=1 // pred_region
      %60 = dma.done [#allocation5], 512
    $region29: #{instance_prompt_forward.1} parent=1 // pred_fallthru
      _
    // Predicated region
    $region30: #{instance_prompt_forward.1} parent=1 // pred_check
      _
    $region31: #{instance_prompt_forward.1} parent=1 // pred_check_branch
      %62 = sbr.rel (0) target = $region33
    $region32: #{instance_prompt_forward.1} parent=1 // pred_region
      %64 = dma.done [#allocation5], 1024
    $region33: #{instance_prompt_forward.1} parent=1 // pred_fallthru
      _
    %v66 = vld [vmem:[#allocation2] sm:$0xff]
    %v67 = vld [vmem:[#allocation4] sm:$0xff]
    %v68 = vld [vmem:[#allocation4 + $0x8] sm:$0xff]
    %v69 = vld [vmem:[#allocation4 + $0x10] sm:$0xff]
    %v70 = vld [vmem:[#allocation4 + $0x18] sm:$0xff]
    %v71 = vld [vmem:[#allocation6] sm:$0xff]
    %v72 = vld [vmem:[#allocation6 + $0x8] sm:$0xff]
    %v73 = vld [vmem:[#allocation6 + $0x10] sm:$0xff]
    %v74 = vld [vmem:[#allocation6 + $0x18] sm:$0xff]
    %v75 = vld [vmem:[#allocation6 + $0x20] sm:$0xff]
    %v76 = vld [vmem:[#allocation6 + $0x28] sm:$0xff]
    %v77 = vld [vmem:[#allocation6 + $0x30] sm:$0xff]
    %v78 = vld [vmem:[#allocation6 + $0x38] sm:$0xff]
    %v79 = vpack.c.bf16 %v66, %v66
    %v80 = vpack.c.bf16 %v68, %v67
    %v81 = vpack.c.bf16 %v70, %v69
    %v82 = vpack.c.bf16 %v72, %v71
    %v83 = vpack.c.bf16 %v74, %v73
    %v84 = vpack.c.bf16 %v76, %v75
    %v85 = vpack.c.bf16 %v78, %v77
    %v86 = vld [vmem:[%s2] sm:$0x1]
    %v88 = vperm.slane %v86, 0
    %vm90 = vcmask 261120
    %v92 = vsel %vm90, %v79, 0
    %94 = vmatpush.bf16.msra.mxu0 0
    %95 = vmatpush.bf16.msra.mxu0 0
    %96 = vmatpush.bf16.msra.mxu0 0
    %97 = vmatpush.bf16.msra.mxu0 0
    %98 = vmatpush.bf16.msra.mxu0 0
    %99 = vmatpush.bf16.msra.mxu0 0
    %100 = vmatpush.bf16.msra.mxu0 %v81
    %101 = vmatpush.bf16.msra.mxu0 %v80
    %102 = vmatmul.bf16.gmra.mxu0 %v92
    %v103 = vpop.f32.mrf.mxu0
    %v104 = vadd.f32 %v88, %v103
    %v105 = vpop.f32.mrf.mxu0
    %106 = vdwg.mxu0
    %v107 = vmul.f32 %v104, %v104
    %v108 = vmul.f32 %v104, %v107
    %v109 = vmul.f32 %v108, 0.044715
    %v110 = vadd.f32 %v104, %v109
    %v111 = vmul.f32 %v110, 0.7978846
    %v112 = vtanh.pop %v111
    %v113 = vadd.f32 %v112, 1.0
    %v114 = vmul.f32 %v113, 0.5
    %v115 = vmul.f32 %v104, %v114
    %v116 = vpack.c.bf16 %v115, %v115
    %v117 = vld [vmem:[%s4] sm:$0x1]
    %v119 = vperm.slane %v117, 0
    %vm121 = vcmask 523264
    %v123 = vsel %vm121, %v116, 0
    %125 = vmatpush.bf16.msra.mxu0 0
    %126 = vmatpush.bf16.msra.mxu0 0
    %127 = vmatpush.bf16.msra.mxu0 0
    %128 = vmatpush.bf16.msra.mxu0 0
    %129 = vmatpush.bf16.msra.mxu0 %v85
    %130 = vmatpush.bf16.msra.mxu0 %v84
    %131 = vmatpush.bf16.msra.mxu0 %v83
    %132 = vmatpush.bf16.msra.mxu0 %v82
    %133 = vmatmul.bf16.gmra.mxu0 %v123
    %v134 = vpop.f32.mrf.mxu0
    %v135 = vadd.f32 %v119, %v134
    %v136 = vpop.f32.mrf.mxu0
    %137 = vdwg.mxu0
    %138 = vst [vmem:[%s5] sm:$0xff] %v135
    // Predicated region
    $region34: #{instance_prompt_forward.1} parent=1 // pred_check
      _
    $region35: #{instance_prompt_forward.1} parent=1 // pred_check_branch
      %140 = sbr.rel (0) target = $region37
    $region36: #{instance_prompt_forward.1} parent=1 // pred_region
      _
    $region37: #{instance_prompt_forward.1} parent=1 // pred_fallthru
      _
    // Predicated region
    $region38: #{instance_prompt_forward.1} parent=1 // pred_check
      _
    $region39: #{instance_prompt_forward.1} parent=1 // pred_check_branch
      %142 = sbr.rel (0) target = $region41
    $region40: #{instance_prompt_forward.1} parent=1 // pred_region
      _
    $region41: #{instance_prompt_forward.1} parent=1 // pred_fallthru
      _
    %143 = vsyncpa [#allocation3], 1
    %144 = vsyncpa [#allocation5], 1

</llo_original>
